<compile_context>
chip_gen: v5e
topology: v5e:2x2
jax: 0.10.0
libtpu: 0.0.40
codegen_flags: <defaults>
</compile_context>

<pallas_src>
import math
from functools import partial

import numpy as np
import jax
import jax.numpy as jnp
from jax.experimental import pallas as pl
from jax.experimental.pallas import tpu as pltpu

NEURON = 64        # hidden width of the three GCN layers
FPAD = 128         # lane-dense feature width used inside the tiled path
ATTN_HIDDEN = 16   # attention1 output width
YS = 1             # attention2 output width

_DEFAULT_VMEM_BYTES = 64 * 1024 * 1024   # conservative fallback (v7x per-core VMEM)
_VMEM_CAPACITY_CACHE = None


def _vmem_capacity_bytes():
    global _VMEM_CAPACITY_CACHE
    if _VMEM_CAPACITY_CACHE is None:
        try:
            _VMEM_CAPACITY_CACHE = int(pltpu.get_tpu_info().vmem_capacity_bytes)
        except Exception:  # pragma: no cover - fall back to the smallest generation
            _VMEM_CAPACITY_CACHE = _DEFAULT_VMEM_BYTES
    return _VMEM_CAPACITY_CACHE


def _ru(x, m):
    return ((x + m - 1) // m) * m


def _vmem_spec():
    return pl.BlockSpec(memory_space=pltpu.MemorySpace.VMEM)


def _resident_vmem_estimate(n, fin, g, fc):
    """Footprint of the fused resident kernel (lane padded).  Grid-less VMEM
    inputs are not double-buffered, so Â is counted once (review feedback)."""
    n8 = _ru(max(n, 8), 8)
    adj_b = n8 * _ru(n, 128) * 2                    # bf16 Â, single copy
    x_b = n8 * _ru(fin, 128) * 4
    h_b = 5 * n8 * 128 * 4                          # live (N, 64->128 lane) temporaries
    att_b = 2 * n8 * _ru(g, 128) * 4 + n8 * _ru(fc, 128) * 4
    return adj_b + x_b + h_b + att_b + (4 << 20)


# ----------------------------------------------------------------------------
# Shared closeness-attention math ('self_average').  Pure jnp so it can run
# both inside a Pallas kernel (fused path) and as a plain-XLA epilogue (tiled
# path).  All of it stays in f32.
# ----------------------------------------------------------------------------
def _closeness_attention(h, mask, close, wc_row, bc, a1w, a1b, a2w, a2b):
    # Closeness score on the VPU: Fc is tiny, avoid a degenerate (N,Fc)@(Fc,1) MXU op.
    s = jnp.sum(close * wc_row, axis=-1, keepdims=True) + bc            # (N, 1)
    logits = jnp.where(mask > 0, s, jnp.float32(-1e30))                 # (N, G)
    mx = jnp.max(logits, axis=0, keepdims=True)                         # (1, G)
    p = jnp.exp(logits - mx) * mask                                     # (N, G)
    denom = jnp.maximum(jnp.sum(p, axis=0, keepdims=True), 1e-20)       # empty-graph guard
    p = p / denom                                                       # per-graph softmax
    # self_average: mean((softmax * n_g) * h) == softmax^T @ h
    agg = jax.lax.dot_general(p, h, (((0,), (0,)), ((), ())),
                              preferred_element_type=jnp.float32)       # (G, 64)
    a1 = jnp.maximum(jnp.dot(agg, a1w, preferred_element_type=jnp.float32) + a1b, 0.0)
    return jnp.dot(a1, a2w, preferred_element_type=jnp.float32) + a2b   # (G, ys)


# ----------------------------------------------------------------------------
# Kernel A (resident regime): Â stays in VMEM across all 3 GCN layers and the
# attention epilogue is fused in (no HBM round trip for h, single launch).
# ----------------------------------------------------------------------------
def _fused_resident_kernel(adj_ref, x_ref, mask_ref, close_ref,
                           w1_ref, b1_ref, w2_ref, b2_ref, w3_ref, b3_ref,
                           wc_ref, bc_ref, a1w_ref, a1b_ref, a2w_ref, a2b_ref,
                           out_ref):
    adj = adj_ref[...]                                   # (N, N) bf16, DMA'd once, reused 3x
    h = x_ref[...]                                       # (N, Fin) f32

    def gcn(h, w, b):
        z = jnp.dot(h, w, preferred_element_type=jnp.float32)            # (N, 64) f32
        z = jnp.dot(adj, z.astype(jnp.bfloat16),
                    preferred_element_type=jnp.float32) + b              # bf16 MXU, f32 acc
        return jnp.maximum(z, 0.0)

    h = gcn(h, w1_ref[...], b1_ref[...])
    h = gcn(h, w2_ref[...], b2_ref[...])
    h = gcn(h, w3_ref[...], b3_ref[...])

    out_ref[...] = _closeness_attention(
        h, mask_ref[...], close_ref[...], wc_ref[...], bc_ref[...],
        a1w_ref[...], a1b_ref[...], a2w_ref[...], a2b_ref[...])


@jax.jit
def _forward_resident(adj_bf16, x, closeness, mask_onehot, wc_row, params):
    n, fin = x.shape
    g = mask_onehot.shape[1]
    fc = closeness.shape[1]
    est = _resident_vmem_estimate(n, fin, g, fc)
    vmem_limit = min(int(0.95 * _vmem_capacity_bytes()),
                     max(int(1.25 * est), 32 * 1024 * 1024))
    return pl.pallas_call(
        _fused_resident_kernel,
        out_shape=jax.ShapeDtypeStruct((g, YS), jnp.float32),
        in_specs=[_vmem_spec()] * 16,
        out_specs=_vmem_spec(),
        compiler_params=pltpu.CompilerParams(vmem_limit_bytes=vmem_limit),
    )(adj_bf16, x, mask_onehot, closeness,
      params["w1"], params["b1"], params["w2"], params["b2"],
      params["w3"], params["b3"],
      wc_row, params["bc"],
      params["a1w"], params["a1b"], params["a2w"], params["a2b"])


# ----------------------------------------------------------------------------
# Kernel B (tiled regime): block-sparse  out = relu(Â @ z + b)  over a 1-D
# schedule of Â tiles that intersect the diagonal graph blocks.
#   * schedule (rows/cols/first/last) arrives via scalar prefetch (SMEM)
#   * z is VMEM-resident (constant index_map), sliced per step with pl.ds
#   * out_ref IS the f32 accumulator (same row block across consecutive steps)
# ----------------------------------------------------------------------------
def _build_block_schedule(graph_sizes, n_pad, tm, tk):
    """Row-major list of (row_block, col_block) Â tiles that intersect a
    diagonal graph block; everything else is exactly zero and skipped."""
    offs = np.concatenate([[0], np.cumsum(np.asarray(graph_sizes, np.int64))])
    rows, cols = [], []
    for i in range(n_pad // tm):
        r0, r1 = i * tm, (i + 1) * tm
        ks = set()
        for gi in range(len(graph_sizes)):
            g0, g1 = int(offs[gi]), int(offs[gi + 1])
            if g1 <= g0 or g1 <= r0 or g0 >= r1:
                continue
            ks.update(range(g0 // tk, (g1 - 1) // tk + 1))
        for k in sorted(ks):
            rows.append(i)
            cols.append(k)
    rows = np.asarray(rows, np.int32)
    cols = np.asarray(cols, np.int32)
    t = rows.shape[0]
    firsts = np.zeros((t,), np.int32)
    lasts = np.zeros((t,), np.int32)
    for idx in range(t):
        if idx == 0 or rows[idx] != rows[idx - 1]:
            firsts[idx] = 1
        if idx == t - 1 or rows[idx + 1] != rows[idx]:
            lasts[idx] = 1
    return rows, cols, firsts, lasts


def _adj_spmm_relu(rows, cols, firsts, lasts, adj_p, z_bf16, bias_p, *, tm, tk):
    n_pad = adj_p.shape[0]
    num_tiles = rows.shape[0]

    def kernel(rows_ref, cols_ref, firsts_ref, lasts_ref,
               adj_ref, z_ref, b_ref, out_ref):
        t = pl.program_id(0)

        @pl.when(firsts_ref[t] == 1)            # first K tile of this row block
        def _():
            out_ref[...] = jnp.zeros_like(out_ref)

        start = pl.multiple_of(cols_ref[t] * tk, tk)
        z_tile = z_ref[pl.ds(start, tk), :]     # resident z, sliced in VMEM
        out_ref[...] += jnp.dot(adj_ref[...], z_tile,
                                preferred_element_type=jnp.float32)

        @pl.when(lasts_ref[t] == 1)             # last K tile: bias + ReLU in place
        def _():
            out_ref[...] = jnp.maximum(out_ref[...] + b_ref[...], 0.0)

    need = (3 * tm * tk * 2          # Â tiles (double-buffered + headroom), bf16
            + 3 * n_pad * FPAD * 2   # resident z (+ buffer headroom), bf16
            + 3 * tm * FPAD * 4      # out/accumulator tiles, f32
            + (4 << 20))
    vmem_limit = min(int(0.9 * _vmem_capacity_bytes()),
                     max(need, 32 * 1024 * 1024))

    return pl.pallas_call(
        kernel,
        out_shape=jax.ShapeDtypeStruct((n_pad, FPAD), jnp.float32),
        grid_spec=pltpu.PrefetchScalarGridSpec(
            num_scalar_prefetch=4,
            grid=(num_tiles,),
            in_specs=[
                pl.BlockSpec((tm, tk), lambda t, r, c, f, l: (r[t], c[t])),   # Â tile
                pl.BlockSpec((n_pad, FPAD), lambda t, r, c, f, l: (0, 0)),    # z resident
                pl.BlockSpec((1, FPAD), lambda t, r, c, f, l: (0, 0)),        # bias resident
            ],
            out_specs=pl.BlockSpec((tm, FPAD), lambda t, r, c, f, l: (r[t], 0)),
        ),
        compiler_params=pltpu.CompilerParams(
            dimension_semantics=("arbitrary",),
            vmem_limit_bytes=vmem_limit,
        ),
    )(rows, cols, firsts, lasts, adj_p, z_bf16, bias_p)


@partial(jax.jit, static_argnames=("tm", "tk", "n_pad"))
def _forward_tiled(rows, cols, firsts, lasts, adj_bf16, x, closeness,
                   mask_onehot, wc_row, params, *, tm, tk, n_pad):
    n = x.shape[0]
    pad = n_pad - n
    adj_p = jnp.pad(adj_bf16, ((0, pad), (0, pad)))      # zero pad: real rows unaffected
    row_mask = (jnp.arange(n_pad) < n)[:, None]          # kills padded / unvisited rows

    fpad = FPAD - NEURON
    ws = (jnp.pad(params["w1"], ((0, 0), (0, fpad))),
          jnp.pad(params["w2"], ((0, fpad), (0, fpad))),
          jnp.pad(params["w3"], ((0, fpad), (0, fpad))))
    bs = (jnp.pad(params["b1"], ((0, 0), (0, fpad))),
          jnp.pad(params["b2"], ((0, 0), (0, fpad))),
          jnp.pad(params["b3"], ((0, 0), (0, fpad))))

    h = jnp.pad(x, ((0, pad), (0, 0)))
    for w_p, b_p in zip(ws, bs):
        z = jnp.dot(h, w_p, preferred_element_type=jnp.float32)      # small hW in XLA
        z = jnp.where(row_mask, z, 0.0).astype(jnp.bfloat16)         # (n_pad, 128) lane-dense
        h = _adj_spmm_relu(rows, cols, firsts, lasts, adj_p, z, b_p, tm=tm, tk=tk)
    h = h[:n, :NEURON]
    # Tiny epilogue -> plain XLA (a second Pallas launch would cost more than it computes).
    return _closeness_attention(h, mask_onehot, closeness, wc_row, params["bc"],
                                params["a1w"], params["a1b"],
                                params["a2w"], params["a2b"])


# ----------------------------------------------------------------------------
# Top-level wrapper: choose residency vs tiling from the per-generation VMEM.
# ----------------------------------------------------------------------------
def _choose_tiles(n):
    n128 = _ru(max(n, 128), 128)
    if n128 >= 4096:
        return 512, 2048
    if n128 >= 1024:
        return 512, 1024
    if n128 >= 512:
        return 512, 512
    return n128, n128


def gcn_structural_forward(adj_norm, x, closeness, mask_onehot, params, *,
                           graph_sizes=None, force_tiled=False, tm=None, tk=None):
    n, fin = x.shape
    g = mask_onehot.shape[1]
    fc = closeness.shape[1]
    adj_bf16 = adj_norm.astype(jnp.bfloat16)             # halve Â bytes over HBM/VMEM
    wc_row = jnp.reshape(params["wc"], (1, -1))          # (1, Fc) closeness weights as a row

    use_tiled = force_tiled or (
        _resident_vmem_estimate(n, fin, g, fc) > 0.85 * _vmem_capacity_bytes())
    if not use_tiled:
        return _forward_resident(adj_bf16, x, closeness, mask_onehot, wc_row, params)

    if tm is None or tk is None:
        tm, tk = _choose_tiles(n)
    n_pad = _ru(n, math.lcm(int(tm), int(tk)))
    if graph_sizes is None:
        graph_sizes = (n,)   # dense fallback: one block covering every node
    assert int(sum(graph_sizes)) == n, "graph_sizes must sum to the node count"
    rows, cols, firsts, lasts = _build_block_schedule(tuple(int(s) for s in graph_sizes),
                                                      n_pad, tm, tk)
    return _forward_tiled(jnp.asarray(rows), jnp.asarray(cols),
                          jnp.asarray(firsts), jnp.asarray(lasts),
                          adj_bf16, x, closeness, mask_onehot, wc_row, params,
                          tm=int(tm), tk=int(tk), n_pad=int(n_pad))


# ----------------------------------------------------------------------------
# Glue: dense GCN-normalized adjacency and membership one-hot (plain JAX).
# ----------------------------------------------------------------------------
def build_normalized_adjacency(edge_index, num_nodes):
    src, dst = edge_index[0], edge_index[1]
    a = jnp.zeros((num_nodes, num_nodes), jnp.float32).at[dst, src].set(1.0)
    a = a + jnp.eye(num_nodes, dtype=jnp.float32)        # self-loops
    deg = jnp.sum(a, axis=1)
    dinv = jax.lax.rsqrt(deg)
    return a * dinv[:, None] * dinv[None, :]


def batch_one_hot(batch, num_graphs):
    return (batch[:, None] == jnp.arange(num_graphs)[None, :]).astype(jnp.float32)


# ----------------------------------------------------------------------------
# Pure-JAX reference (mirrors the PyTorch forward; the only deliberate
# deviation is that Â @ (hW) uses bf16 operands with f32 accumulation, matching
# the Pallas kernels' mixed-precision choice).
# ----------------------------------------------------------------------------
def reference_forward(adj, x, closeness, batch_np, num_graphs, params):
    adj_bf = adj.astype(jnp.bfloat16)

    def gcn(h, w, b):
        z = jnp.dot(h, w)
        z = jnp.dot(adj_bf, z.astype(jnp.bfloat16),
                    preferred_element_type=jnp.float32) + b
        return jax.nn.relu(z)

    h = gcn(x, params["w1"], params["b1"][0])
    h = gcn(h, params["w2"], params["b2"][0])
    h = gcn(h, params["w3"], params["b3"][0])

    outs = []
    for gidx in range(num_graphs):
        idx = np.where(batch_np == gidx)[0]
        hg = h[idx]
        cg = closeness[idx]
        s = cg @ params["wc"] + params["bc"][0]           # (n_g, 1)
        p = jax.nn.softmax(s, axis=0)
        curr = hg.shape[0]
        att = jnp.mean((p * curr) * hg, axis=0)           # self_average
        a1 = jax.nn.relu(att @ params["a1w"] + params["a1b"][0])
        outs.append(a1 @ params["a2w"] + params["a2b"][0])
    return jnp.stack(outs)


# ----------------------------------------------------------------------------
# Demo / self-check
# ----------------------------------------------------------------------------
def _make_params(key, x_s, attn_num_feature):
    ks = jax.random.split(key, 12)

    def rnd(k, shape):
        return 0.1 * jax.random.normal(k, shape, jnp.float32)

    return {
        "w1": rnd(ks[0], (x_s, NEURON)), "b1": rnd(ks[1], (1, NEURON)),
        "w2": rnd(ks[2], (NEURON, NEURON)), "b2": rnd(ks[3], (1, NEURON)),
        "w3": rnd(ks[4], (NEURON, NEURON)), "b3": rnd(ks[5], (1, NEURON)),
        "wc": rnd(ks[6], (attn_num_feature, 1)), "bc": rnd(ks[7], (1, 1)),
        "a1w": rnd(ks[8], (NEURON, ATTN_HIDDEN)), "a1b": rnd(ks[9], (1, ATTN_HIDDEN)),
        "a2w": rnd(ks[10], (ATTN_HIDDEN, YS)), "a2b": rnd(ks[11], (1, YS)),
    }


def _ring_edges(graph_sizes):
    src, dst = [], []
    base = 0
    for sz in graph_sizes:
        for i in range(sz):
            a, b = base + i, base + (i + 1) % sz
            src += [a, b]
            dst += [b, a]
        base += sz
    return jnp.asarray(np.stack([src, dst]), dtype=jnp.int32)


def _run_case(key, graph_sizes, x_s, fc, params, **fwd_kwargs):
    n = int(sum(graph_sizes))
    g = len(graph_sizes)
    kx, kc = jax.random.split(key)
    x = jax.random.normal(kx, (n, x_s), jnp.float32)
    closeness = jax.random.normal(kc, (n, fc), jnp.float32)
    batch_np = np.concatenate([np.full(sz, i, np.int32)
                               for i, sz in enumerate(graph_sizes)])
    edge_index = _ring_edges(graph_sizes)
    adj_norm = build_normalized_adjacency(edge_index, n)
    mask_onehot = batch_one_hot(jnp.asarray(batch_np), g)

    out = gcn_structural_forward(adj_norm, x, closeness, mask_onehot, params,
                                 graph_sizes=graph_sizes, **fwd_kwargs)
    out = jax.block_until_ready(out)
    ref = reference_forward(adj_norm, x, closeness, batch_np, g, params)
    assert out.shape == (g, YS), out.shape
    np.testing.assert_allclose(np.asarray(out), np.asarray(ref),
                               rtol=2e-2, atol=2e-3)
    return out


if __name__ == "__main__":
    X_S = 8                       # GCN input feature dim (x_s)
    ATTN_NUM_FEATURE = 4          # args.attention_num_feature

    root = jax.random.PRNGKey(0)
    kp, k1, k2, k3 = jax.random.split(root, 4)
    params = _make_params(kp, X_S, ATTN_NUM_FEATURE)

    # Case 1: small batch (2 graphs x 8 nodes) -> fused VMEM-resident kernel
    # (Â read from HBM once, 3 GCN layers + closeness attention in one launch).
    _run_case(k1, (8, 8), X_S, ATTN_NUM_FEATURE, params)

    # Case 2: 3 graphs (100, 100, 300), forced through the block-sparse tiled
    # path with 128x128 tiles: only 12 of 16 Â tiles intersect the diagonal
    # graph blocks (off-diagonal zeros skipped), multiple K tiles per row
    # block, first/last init/finalize gating, dynamic resident-z slicing.
    _run_case(k2, (100, 100, 300), X_S, ATTN_NUM_FEATURE, params,
              force_tiled=True, tm=128, tk=128)

    # Case 3: 2 graphs (500, 460), forced tiled with the default tile choice
    # (tm=tk=512, n_pad=1024): exercises the large-tile path, 512-row dynamic
    # z slices and padding rows beyond the real node count.
    _run_case(k3, (500, 460), X_S, ATTN_NUM_FEATURE, params, force_tiled=True)

    print("KERNEL_OK")
</pallas_src>

<mosaic_0001>
module attributes {stable_mosaic.version = 11 : i64} {
  func.func @_fused_resident_kernel(%arg0: memref<16x16xbf16, #tpu.memory_space<vmem>>, %arg1: memref<16x8xf32, #tpu.memory_space<vmem>>, %arg2: memref<16x2xf32, #tpu.memory_space<vmem>>, %arg3: memref<16x4xf32, #tpu.memory_space<vmem>>, %arg4: memref<8x64xf32, #tpu.memory_space<vmem>>, %arg5: memref<1x64xf32, #tpu.memory_space<vmem>>, %arg6: memref<64x64xf32, #tpu.memory_space<vmem>>, %arg7: memref<1x64xf32, #tpu.memory_space<vmem>>, %arg8: memref<64x64xf32, #tpu.memory_space<vmem>>, %arg9: memref<1x64xf32, #tpu.memory_space<vmem>>, %arg10: memref<1x4xf32, #tpu.memory_space<vmem>>, %arg11: memref<1x1xf32, #tpu.memory_space<vmem>>, %arg12: memref<64x16xf32, #tpu.memory_space<vmem>>, %arg13: memref<1x16xf32, #tpu.memory_space<vmem>>, %arg14: memref<16x1xf32, #tpu.memory_space<vmem>>, %arg15: memref<1x1xf32, #tpu.memory_space<vmem>>, %arg16: memref<2x1xf32, #tpu.memory_space<vmem>>) attributes {dimension_semantics = [], scalar_prefetch = 0 : i64, scratch_operands = 0 : i64, tpu.core_type = #tpu.core_type<tc>} {
    %c0 = arith.constant 0 : index
    %c0_0 = arith.constant 0 : index
    %0 = vector.load %arg0[%c0, %c0_0] : memref<16x16xbf16, #tpu.memory_space<vmem>>, vector<16x16xbf16>
    %c0_1 = arith.constant 0 : index
    %c0_2 = arith.constant 0 : index
    %1 = vector.load %arg1[%c0_1, %c0_2] : memref<16x8xf32, #tpu.memory_space<vmem>>, vector<16x8xf32>
    %c0_3 = arith.constant 0 : index
    %c0_4 = arith.constant 0 : index
    %2 = vector.load %arg4[%c0_3, %c0_4] : memref<8x64xf32, #tpu.memory_space<vmem>>, vector<8x64xf32>
    %c0_5 = arith.constant 0 : index
    %c0_6 = arith.constant 0 : index
    %3 = vector.load %arg5[%c0_5, %c0_6] : memref<1x64xf32, #tpu.memory_space<vmem>>, vector<1x64xf32>
    %cst = arith.constant dense<0.000000e+00> : vector<16x64xf32>
    %4 = tpu.matmul %1, %2, %cst {dimension_numbers = #tpu.dot_dimension_numbers<[1], [0], [0], [1], [0, 0, 1, 1], [], []>} : vector<16x8xf32>, vector<8x64xf32>, vector<16x64xf32> -> vector<16x64xf32>
    %5 = arith.truncf %4 : vector<16x64xf32> to vector<16x64xbf16>
    %cst_7 = arith.constant dense<0.000000e+00> : vector<16x64xf32>
    %6 = tpu.matmul %0, %5, %cst_7 {dimension_numbers = #tpu.dot_dimension_numbers<[1], [0], [0], [1], [0, 0, 1, 1], [], []>} : vector<16x16xbf16>, vector<16x64xbf16>, vector<16x64xf32> -> vector<16x64xf32>
    %7 = vector.broadcast %3 : vector<1x64xf32> to vector<16x64xf32>
    %8 = arith.addf %6, %7 : vector<16x64xf32>
    %cst_8 = arith.constant 0.000000e+00 : f32
    %9 = vector.broadcast %cst_8 : f32 to vector<16x64xf32>
    %10 = arith.maximumf %8, %9 : vector<16x64xf32>
    %c0_9 = arith.constant 0 : index
    %c0_10 = arith.constant 0 : index
    %11 = vector.load %arg6[%c0_9, %c0_10] : memref<64x64xf32, #tpu.memory_space<vmem>>, vector<64x64xf32>
    %c0_11 = arith.constant 0 : index
    %c0_12 = arith.constant 0 : index
    %12 = vector.load %arg7[%c0_11, %c0_12] : memref<1x64xf32, #tpu.memory_space<vmem>>, vector<1x64xf32>
    %cst_13 = arith.constant dense<0.000000e+00> : vector<16x64xf32>
    %13 = tpu.matmul %10, %11, %cst_13 {dimension_numbers = #tpu.dot_dimension_numbers<[1], [0], [0], [1], [0, 0, 1, 1], [], []>} : vector<16x64xf32>, vector<64x64xf32>, vector<16x64xf32> -> vector<16x64xf32>
    %14 = arith.truncf %13 : vector<16x64xf32> to vector<16x64xbf16>
    %cst_14 = arith.constant dense<0.000000e+00> : vector<16x64xf32>
    %15 = tpu.matmul %0, %14, %cst_14 {dimension_numbers = #tpu.dot_dimension_numbers<[1], [0], [0], [1], [0, 0, 1, 1], [], []>} : vector<16x16xbf16>, vector<16x64xbf16>, vector<16x64xf32> -> vector<16x64xf32>
    %16 = vector.broadcast %12 : vector<1x64xf32> to vector<16x64xf32>
    %17 = arith.addf %15, %16 : vector<16x64xf32>
    %cst_15 = arith.constant 0.000000e+00 : f32
    %18 = vector.broadcast %cst_15 : f32 to vector<16x64xf32>
    %19 = arith.maximumf %17, %18 : vector<16x64xf32>
    %c0_16 = arith.constant 0 : index
    %c0_17 = arith.constant 0 : index
    %20 = vector.load %arg8[%c0_16, %c0_17] : memref<64x64xf32, #tpu.memory_space<vmem>>, vector<64x64xf32>
    %c0_18 = arith.constant 0 : index
    %c0_19 = arith.constant 0 : index
    %21 = vector.load %arg9[%c0_18, %c0_19] : memref<1x64xf32, #tpu.memory_space<vmem>>, vector<1x64xf32>
    %cst_20 = arith.constant dense<0.000000e+00> : vector<16x64xf32>
    %22 = tpu.matmul %19, %20, %cst_20 {dimension_numbers = #tpu.dot_dimension_numbers<[1], [0], [0], [1], [0, 0, 1, 1], [], []>} : vector<16x64xf32>, vector<64x64xf32>, vector<16x64xf32> -> vector<16x64xf32>
    %23 = arith.truncf %22 : vector<16x64xf32> to vector<16x64xbf16>
    %cst_21 = arith.constant dense<0.000000e+00> : vector<16x64xf32>
    %24 = tpu.matmul %0, %23, %cst_21 {dimension_numbers = #tpu.dot_dimension_numbers<[1], [0], [0], [1], [0, 0, 1, 1], [], []>} : vector<16x16xbf16>, vector<16x64xbf16>, vector<16x64xf32> -> vector<16x64xf32>
    %25 = vector.broadcast %21 : vector<1x64xf32> to vector<16x64xf32>
    %26 = arith.addf %24, %25 : vector<16x64xf32>
    %cst_22 = arith.constant 0.000000e+00 : f32
    %27 = vector.broadcast %cst_22 : f32 to vector<16x64xf32>
    %28 = arith.maximumf %26, %27 : vector<16x64xf32>
    %c0_23 = arith.constant 0 : index
    %c0_24 = arith.constant 0 : index
    %29 = vector.load %arg2[%c0_23, %c0_24] : memref<16x2xf32, #tpu.memory_space<vmem>>, vector<16x2xf32>
    %c0_25 = arith.constant 0 : index
    %c0_26 = arith.constant 0 : index
    %30 = vector.load %arg3[%c0_25, %c0_26] : memref<16x4xf32, #tpu.memory_space<vmem>>, vector<16x4xf32>
    %c0_27 = arith.constant 0 : index
    %c0_28 = arith.constant 0 : index
    %31 = vector.load %arg10[%c0_27, %c0_28] : memref<1x4xf32, #tpu.memory_space<vmem>>, vector<1x4xf32>
    %c0_29 = arith.constant 0 : index
    %c0_30 = arith.constant 0 : index
    %32 = vector.load %arg11[%c0_29, %c0_30] : memref<1x1xf32, #tpu.memory_space<vmem>>, vector<1x1xf32>
    %c0_31 = arith.constant 0 : index
    %c0_32 = arith.constant 0 : index
    %33 = vector.load %arg12[%c0_31, %c0_32] : memref<64x16xf32, #tpu.memory_space<vmem>>, vector<64x16xf32>
    %c0_33 = arith.constant 0 : index
    %c0_34 = arith.constant 0 : index
    %34 = vector.load %arg13[%c0_33, %c0_34] : memref<1x16xf32, #tpu.memory_space<vmem>>, vector<1x16xf32>
    %c0_35 = arith.constant 0 : index
    %c0_36 = arith.constant 0 : index
    %35 = vector.load %arg14[%c0_35, %c0_36] : memref<16x1xf32, #tpu.memory_space<vmem>>, vector<16x1xf32>
    %c0_37 = arith.constant 0 : index
    %c0_38 = arith.constant 0 : index
    %36 = vector.load %arg15[%c0_37, %c0_38] : memref<1x1xf32, #tpu.memory_space<vmem>>, vector<1x1xf32>
    %37 = vector.broadcast %31 : vector<1x4xf32> to vector<16x4xf32>
    %38 = arith.mulf %30, %37 : vector<16x4xf32>
    %cst_39 = arith.constant dense<0.000000e+00> : vector<16xf32>
    %39 = vector.multi_reduction <add>, %38, %cst_39 [1] : vector<16x4xf32> to vector<16xf32>
    %40 = vector.shape_cast %39 : vector<16xf32> to vector<16x1xf32>
    %41 = vector.broadcast %32 : vector<1x1xf32> to vector<16x1xf32>
    %42 = arith.addf %40, %41 : vector<16x1xf32>
    %cst_40 = arith.constant 0.000000e+00 : f32
    %43 = vector.broadcast %cst_40 : f32 to vector<16x2xf32>
    %44 = arith.cmpf ogt, %29, %43 : vector<16x2xf32>
    %cst_41 = arith.constant -1.000000e+30 : f32
    %45 = vector.shape_cast %42 : vector<16x1xf32> to vector<16x1xf32>
    %46 = vector.broadcast %45 : vector<16x1xf32> to vector<16x2xf32>
    %47 = vector.broadcast %cst_41 : f32 to vector<16x2xf32>
    %48 = arith.select %44, %46, %47 : vector<16x2xi1>, vector<16x2xf32>
    %cst_42 = arith.constant dense<0xFF800000> : vector<2xf32>
    %49 = vector.multi_reduction <maximumf>, %48, %cst_42 [0] : vector<16x2xf32> to vector<2xf32>
    %50 = vector.shape_cast %49 : vector<2xf32> to vector<1x2xf32>
    %51 = vector.broadcast %50 : vector<1x2xf32> to vector<16x2xf32>
    %52 = arith.subf %48, %51 : vector<16x2xf32>
    %53 = math.exp %52 : vector<16x2xf32>
    %54 = arith.mulf %53, %29 : vector<16x2xf32>
    %cst_43 = arith.constant dense<0.000000e+00> : vector<2xf32>
    %55 = vector.multi_reduction <add>, %54, %cst_43 [0] : vector<16x2xf32> to vector<2xf32>
    %56 = vector.shape_cast %55 : vector<2xf32> to vector<1x2xf32>
    %cst_44 = arith.constant 9.99999968E-21 : f32
    %57 = vector.broadcast %cst_44 : f32 to vector<1x2xf32>
    %58 = arith.maximumf %56, %57 : vector<1x2xf32>
    %59 = vector.broadcast %58 : vector<1x2xf32> to vector<16x2xf32>
    %60 = arith.divf %54, %59 : vector<16x2xf32>
    %cst_45 = arith.constant dense<0.000000e+00> : vector<2x64xf32>
    %61 = tpu.matmul %60, %28, %cst_45 {dimension_numbers = #tpu.dot_dimension_numbers<[0], [0], [1], [1], [0, 1, 1, 1], [], []>} : vector<16x2xf32>, vector<16x64xf32>, vector<2x64xf32> -> vector<2x64xf32>
    %cst_46 = arith.constant dense<0.000000e+00> : vector<2x16xf32>
    %62 = tpu.matmul %61, %33, %cst_46 {dimension_numbers = #tpu.dot_dimension_numbers<[1], [0], [0], [1], [0, 0, 1, 1], [], []>} : vector<2x64xf32>, vector<64x16xf32>, vector<2x16xf32> -> vector<2x16xf32>
    %63 = vector.broadcast %34 : vector<1x16xf32> to vector<2x16xf32>
    %64 = arith.addf %62, %63 : vector<2x16xf32>
    %cst_47 = arith.constant 0.000000e+00 : f32
    %65 = vector.broadcast %cst_47 : f32 to vector<2x16xf32>
    %66 = arith.maximumf %64, %65 : vector<2x16xf32>
    %cst_48 = arith.constant dense<0.000000e+00> : vector<2x1xf32>
    %67 = tpu.matmul %66, %35, %cst_48 {dimension_numbers = #tpu.dot_dimension_numbers<[1], [0], [0], [1], [0, 0, 1, 1], [], []>} : vector<2x16xf32>, vector<16x1xf32>, vector<2x1xf32> -> vector<2x1xf32>
    %68 = vector.broadcast %36 : vector<1x1xf32> to vector<2x1xf32>
    %69 = arith.addf %67, %68 : vector<2x1xf32>
    %c0_49 = arith.constant 0 : index
    %c0_50 = arith.constant 0 : index
    %70 = vector.load %arg16[%c0_49, %c0_50] : memref<2x1xf32, #tpu.memory_space<vmem>>, vector<2x1xf32>
    tpu.vector_store %arg16[%c0_49, %c0_50], %69 {strides = array<i32>} : memref<2x1xf32, #tpu.memory_space<vmem>>, vector<2x1xf32>,
    return
  }
}

</mosaic_0001>

<llo_original>
// kernel: _forward_resident.1
$region0: #{_forward_resident.1}
  #allocation0 [shape = 'u32[]', space=smem, size = 0x4, offset = 0x4, fixed_abs, tag = 'smem constant byte address 0x4 - core index']
  #allocation1 [shape = 'u32[72,128]{1,0:T(1,128)}', space=vmem, size = 0x9000, scoped, tag = 'internal scratch']
  #allocation2 [shape = 'f32[1,1]{1,0:T(1,128)S(1)}', space=vmem, size = 0x200, scoped, tag = 'scoped memory for _forward_resident.1']
  #allocation3 [shape = 'f32[1,1]{1,0:T(1,128)S(1)}', space=vmem, size = 0x200, scoped, tag = 'scoped memory for _forward_resident.1']
  %s0 = inlined_call_operand.vmem [shape: bf16[16,16], index: 0, kind: input, shape index: {}]
  %s1 = inlined_call_operand.vmem [shape: f32[16,8], index: 1, kind: input, shape index: {}]
  %s2 = inlined_call_operand.vmem [shape: f32[16,2], index: 2, kind: input, shape index: {}]
  %s3 = inlined_call_operand.vmem [shape: f32[16,4], index: 3, kind: input, shape index: {}]
  %s4 = inlined_call_operand.vmem [shape: f32[8,64], index: 4, kind: input, shape index: {}]
  %s5 = inlined_call_operand.vmem [shape: f32[1,64], index: 5, kind: input, shape index: {}]
  %s6 = inlined_call_operand.vmem [shape: f32[64,64], index: 6, kind: input, shape index: {}]
  %s7 = inlined_call_operand.vmem [shape: f32[1,64], index: 7, kind: input, shape index: {}]
  %s8 = inlined_call_operand.hbm [shape: f32[64,64], index: 8, kind: input, shape index: {}]
  %s9 = inlined_call_operand.vmem [shape: f32[1,64], index: 9, kind: input, shape index: {}]
  %s10 = inlined_call_operand.vmem [shape: f32[1,4], index: 10, kind: input, shape index: {}]
  %s11 = inlined_call_operand.<no memory space> [shape: f32[1,1], index: 11, kind: input, shape index: {}]
  %s12 = inlined_call_operand.vmem [shape: f32[64,16], index: 12, kind: input, shape index: {}]
  %s13 = inlined_call_operand.vmem [shape: f32[1,16], index: 13, kind: input, shape index: {}]
  %s14 = inlined_call_operand.vmem [shape: f32[16,1], index: 14, kind: input, shape index: {}]
  %s15 = inlined_call_operand.<no memory space> [shape: f32[1,1], index: 15, kind: input, shape index: {}]
  %s16 = inlined_call_operand.vmem [shape: f32[2,1], index: 16, kind: output, shape index: {}]
  %s17 = sld [smem:[#allocation0]]
  $region78: #{_forward_resident.1} parent=0
    _
  %s19 = ssub.s32 1, %s17
  %s20 = scalar_select 0, %s19, %s17
  %v21 = vstv %s11
  %22 = vst [vmem:[#allocation2] sm:$0x1] %v21
  %v23 = vstv %s15
  %24 = vst [vmem:[#allocation3] sm:$0x1] %v23
  $region1: #{_forward_resident.1} parent=0
    #allocation4 [shape = 'u8[32768]{0}', space=vmem, size = 0x8000, scoped, tag = 'input window, operand 8, single buffered']
    #allocation5 [shape = 's32[1]{0}', space=sflag, size = 0x4, scoped, tag = 'scoped memory for _forward_resident.1']
    %25 = vsyncpa [#allocation5], 0
    // Predicated region
    $region2: #{_forward_resident.1} parent=1 // pred_check
      _
    $region3: #{_forward_resident.1} parent=1 // pred_check_branch
      %27 = sbr.rel (0) target = $region5
    $region4: #{_forward_resident.1} parent=1 // pred_region
      _
    $region5: #{_forward_resident.1} parent=1 // pred_fallthru
      _
    // Predicated region
    $region6: #{_forward_resident.1} parent=1 // pred_check
      _
    $region7: #{_forward_resident.1} parent=1 // pred_check_branch
      %29 = sbr.rel (0) target = $region9
    $region8: #{_forward_resident.1} parent=1 // pred_region
      _
    $region9: #{_forward_resident.1} parent=1 // pred_fallthru
      _
    // Predicated region
    $region10: #{_forward_resident.1} parent=1 // pred_check
      _
    $region11: #{_forward_resident.1} parent=1 // pred_check_branch
      %31 = sbr.rel (0) target = $region13
    $region12: #{_forward_resident.1} parent=1 // pred_region
      _
    $region13: #{_forward_resident.1} parent=1 // pred_fallthru
      _
    // Predicated region
    $region14: #{_forward_resident.1} parent=1 // pred_check
      _
    $region15: #{_forward_resident.1} parent=1 // pred_check_branch
      %33 = sbr.rel (0) target = $region17
    $region16: #{_forward_resident.1} parent=1 // pred_region
      _
    $region17: #{_forward_resident.1} parent=1 // pred_fallthru
      _
    // Predicated region
    $region18: #{_forward_resident.1} parent=1 // pred_check
      _
    $region19: #{_forward_resident.1} parent=1 // pred_check_branch
      %35 = sbr.rel (0) target = $region21
    $region20: #{_forward_resident.1} parent=1 // pred_region
      _
    $region21: #{_forward_resident.1} parent=1 // pred_fallthru
      _
    // Predicated region
    $region22: #{_forward_resident.1} parent=1 // pred_check
      _
    $region23: #{_forward_resident.1} parent=1 // pred_check_branch
      %37 = sbr.rel (0) target = $region25
    $region24: #{_forward_resident.1} parent=1 // pred_region
      _
    $region25: #{_forward_resident.1} parent=1 // pred_fallthru
      _
    // Predicated region
    $region26: #{_forward_resident.1} parent=1 // pred_check
      _
    $region27: #{_forward_resident.1} parent=1 // pred_check_branch
      %39 = sbr.rel (0) target = $region29
    $region28: #{_forward_resident.1} parent=1 // pred_region
      _
    $region29: #{_forward_resident.1} parent=1 // pred_fallthru
      _
    // Predicated region
    $region30: #{_forward_resident.1} parent=1 // pred_check
      _
    $region31: #{_forward_resident.1} parent=1 // pred_check_branch
      %41 = sbr.rel (0) target = $region33
    $region32: #{_forward_resident.1} parent=1 // pred_region
      _
    $region33: #{_forward_resident.1} parent=1 // pred_fallthru
      _
    // Predicated region
    $region34: #{_forward_resident.1} parent=1 // pred_check
      _
    $region35: #{_forward_resident.1} parent=1 // pred_check_branch
      %43 = sbr.rel (0) target = $region37
    $region36: #{_forward_resident.1} parent=1 // pred_region
      %45 = vsyncadd [#allocation5], 0
      %s46 = sshll.u32 %s8, 4
      %s47 = int_to_ptr.hbm [resolvable:$true] %s46
      %s48 = sshll.u32 [#allocation4], 4
      %s49 = int_to_ptr.vmem [resolvable:$true] %s48
      %54 = dma.hbm_to_vmem [thread:$0]  %s47, 1024, %s49, [#allocation5], 128, 128, 8
    $region37: #{_forward_resident.1} parent=1 // pred_fallthru
      _
    // Predicated region
    $region38: #{_forward_resident.1} parent=1 // pred_check
      _
    $region39: #{_forward_resident.1} parent=1 // pred_check_branch
      %56 = sbr.rel (0) target = $region41
    $region40: #{_forward_resident.1} parent=1 // pred_region
      _
    $region41: #{_forward_resident.1} parent=1 // pred_fallthru
      _
    // Predicated region
    $region42: #{_forward_resident.1} parent=1 // pred_check
      _
    $region43: #{_forward_resident.1} parent=1 // pred_check_branch
      %58 = sbr.rel (0) target = $region45
    $region44: #{_forward_resident.1} parent=1 // pred_region
      _
    $region45: #{_forward_resident.1} parent=1 // pred_fallthru
      _
    // Predicated region
    $region46: #{_forward_resident.1} parent=1 // pred_check
      _
    $region47: #{_forward_resident.1} parent=1 // pred_check_branch
      %60 = sbr.rel (0) target = $region49
    $region48: #{_forward_resident.1} parent=1 // pred_region
      _
    $region49: #{_forward_resident.1} parent=1 // pred_fallthru
      _
    // Predicated region
    $region50: #{_forward_resident.1} parent=1 // pred_check
      _
    $region51: #{_forward_resident.1} parent=1 // pred_check_branch
      %62 = sbr.rel (0) target = $region53
    $region52: #{_forward_resident.1} parent=1 // pred_region
      _
    $region53: #{_forward_resident.1} parent=1 // pred_fallthru
      _
    // Predicated region
    $region54: #{_forward_resident.1} parent=1 // pred_check
      _
    $region55: #{_forward_resident.1} parent=1 // pred_check_branch
      %64 = sbr.rel (0) target = $region57
    $region56: #{_forward_resident.1} parent=1 // pred_region
      _
    $region57: #{_forward_resident.1} parent=1 // pred_fallthru
      _
    // Predicated region
    $region58: #{_forward_resident.1} parent=1 // pred_check
      _
    $region59: #{_forward_resident.1} parent=1 // pred_check_branch
      %66 = sbr.rel (0) target = $region61
    $region60: #{_forward_resident.1} parent=1 // pred_region
      _
    $region61: #{_forward_resident.1} parent=1 // pred_fallthru
      _
    // Predicated region
    $region62: #{_forward_resident.1} parent=1 // pred_check
      _
    $region63: #{_forward_resident.1} parent=1 // pred_check_branch
      %68 = sbr.rel (0) target = $region65
    $region64: #{_forward_resident.1} parent=1 // pred_region
      _
    $region65: #{_forward_resident.1} parent=1 // pred_fallthru
      _
    // Predicated region
    $region66: #{_forward_resident.1} parent=1 // pred_check
      _
    $region67: #{_forward_resident.1} parent=1 // pred_check_branch
      %70 = sbr.rel (0) target = $region69
    $region68: #{_forward_resident.1} parent=1 // pred_region
      %72 = dma.done [#allocation5], 1024
    $region69: #{_forward_resident.1} parent=1 // pred_fallthru
      _
    %v74 = vld [vmem:[%s0] sm:$0xf]
    %v75 = vld [vmem:[%s0 + $0x4] sm:$0xf]
    %v76 = vld [vmem:[%s1] sm:$0xff]
    %v77 = vld [vmem:[%s1 + $0x8] sm:$0xff]
    %v78 = vld [vmem:[%s4] sm:$0xff]
    %v79 = vld [vmem:[%s5] sm:$0x1]
    %vm80 = vcmask 64512
    %v82 = vsel %vm80, %v76, 0
    %v85 = vsel %vm80, %v77, 0
    %87 = vmatpush.msra.mxu0 0.0
    %88 = vmatpush.msra.mxu0 0.0
    %89 = vmatpush.msra.mxu0 0.0
    %90 = vmatpush.msra.mxu0 0.0
    %91 = vmatpush.msra.mxu0 0.0
    %92 = vmatpush.msra.mxu0 0.0
    %93 = vmatpush.msra.mxu0 0.0
    %94 = vmatpush.msra.mxu0 0.0
    %95 = vmatpush.msra.mxu0 0.0
    %96 = vmatpush.msra.mxu0 0.0
    %97 = vmatpush.msra.mxu0 0.0
    %98 = vmatpush.msra.mxu0 0.0
    %99 = vmatpush.msra.mxu0 0.0
    %100 = vmatpush.msra.mxu0 0.0
    %101 = vmatpush.msra.mxu0 0.0
    %102 = vmatpush.msra.mxu0 %v78
    %103 = vmatmul.f32.gmra.mxu0 %v82
    %v104 = vpop.f32.mrf.mxu0
    %v105 = vadd.f32 0.0, %v104
    %106 = vmatmul.f32.gmra.mxu0 %v85
    %v107 = vpop.f32.mrf.mxu0
    %v108 = vadd.f32 0.0, %v107
    %109 = vdwg.mxu0
    %v110 = vpack.c.bf16 %v108, %v105
    %v112 = vperm.slane %v79, 0
    %v116 = vunpack.c.l.b16 %v74
    %v117 = vunpack.c.l.b16 %v75
    %v118 = vpack.c.b16 %v117, %v116
    %vm119 = vcmask 130048
    %v121 = vsel %vm119, %v118, 0
    %123 = vmatpush.bf16.msra.mxu0 0
    %124 = vmatpush.bf16.msra.mxu0 0
    %125 = vmatpush.bf16.msra.mxu0 0
    %126 = vmatpush.bf16.msra.mxu0 0
    %127 = vmatpush.bf16.msra.mxu0 0
    %128 = vmatpush.bf16.msra.mxu0 0
    %129 = vmatpush.bf16.msra.mxu0 0
    %130 = vmatpush.bf16.msra.mxu0 %v110
    %131 = vmatmul.bf16.gmra.mxu0 %v121
    %v132 = vpop.f32.mrf.mxu0
    %v133 = vadd.f32 %v112, %v132
    %v134 = vpop.f32.mrf.mxu0
    %v135 = vadd.f32 %v112, %v134
    %136 = vdwg.mxu0
    %v137 = vmax.f32 %v133, 0.0
    %v138 = vmax.f32 %v135, 0.0
    %v139 = vld [vmem:[%s6] sm:$0xff]
    %v140 = vld [vmem:[%s6 + $0x8] sm:$0xff]
    %v141 = vld [vmem:[%s6 + $0x10] sm:$0xff]
    %v142 = vld [vmem:[%s6 + $0x18] sm:$0xff]
    %v143 = vld [vmem:[%s6 + $0x20] sm:$0xff]
    %v144 = vld [vmem:[%s6 + $0x28] sm:$0xff]
    %v145 = vld [vmem:[%s6 + $0x30] sm:$0xff]
    %v146 = vld [vmem:[%s6 + $0x38] sm:$0xff]
    %v147 = vld [vmem:[%s7] sm:$0x1]
    %vm148 = vcmask 523264
    %v150 = vsel %vm148, %v137, 0
    %v153 = vsel %vm148, %v138, 0
    %155 = vmatpush.msra.mxu0 0.0
    %156 = vmatpush.msra.mxu0 0.0
    %157 = vmatpush.msra.mxu0 0.0
    %158 = vmatpush.msra.mxu0 0.0
    %159 = vmatpush.msra.mxu0 0.0
    %160 = vmatpush.msra.mxu0 0.0
    %161 = vmatpush.msra.mxu0 0.0
    %162 = vmatpush.msra.mxu0 0.0
    %163 = vmatpush.msra.mxu0 %v146
    %164 = vmatpush.msra.mxu0 %v145
    %165 = vmatpush.msra.mxu0 %v144
    %166 = vmatpush.msra.mxu0 %v143
    %167 = vmatpush.msra.mxu0 %v142
    %168 = vmatpush.msra.mxu0 %v141
    %169 = vmatpush.msra.mxu0 %v140
    %170 = vmatpush.msra.mxu0 %v139
    %171 = vmatmul.f32.gmra.mxu0 %v150
    %v172 = vpop.f32.mrf.mxu0
    %v173 = vadd.f32 0.0, %v172
    %174 = vmatmul.f32.gmra.mxu0 %v153
    %v175 = vpop.f32.mrf.mxu0
    %v176 = vadd.f32 0.0, %v175
    %177 = vdwg.mxu0
    %v178 = vpack.c.bf16 %v176, %v173
    %v180 = vperm.slane %v147, 0
    %182 = vmatpush.bf16.msra.mxu0 0
    %183 = vmatpush.bf16.msra.mxu0 0
    %184 = vmatpush.bf16.msra.mxu0 0
    %185 = vmatpush.bf16.msra.mxu0 0
    %186 = vmatpush.bf16.msra.mxu0 0
    %187 = vmatpush.bf16.msra.mxu0 0
    %188 = vmatpush.bf16.msra.mxu0 0
    %189 = vmatpush.bf16.msra.mxu0 %v178
    %190 = vmatmul.bf16.gmra.mxu0 %v121
    %v191 = vpop.f32.mrf.mxu0
    %v192 = vadd.f32 %v180, %v191
    %v193 = vpop.f32.mrf.mxu0
    %v194 = vadd.f32 %v180, %v193
    %195 = vdwg.mxu0
    %v196 = vmax.f32 %v192, 0.0
    %v197 = vmax.f32 %v194, 0.0
    %v198 = vld [vmem:[#allocation4] sm:$0xff]
    %v199 = vld [vmem:[#allocation4 + $0x8] sm:$0xff]
    %v200 = vld [vmem:[#allocation4 + $0x10] sm:$0xff]
    %v201 = vld [vmem:[#allocation4 + $0x18] sm:$0xff]
    %v202 = vld [vmem:[#allocation4 + $0x20] sm:$0xff]
    %v203 = vld [vmem:[#allocation4 + $0x28] sm:$0xff]
    %v204 = vld [vmem:[#allocation4 + $0x30] sm:$0xff]
    %v205 = vld [vmem:[#allocation4 + $0x38] sm:$0xff]
    %v206 = vld [vmem:[%s9] sm:$0x1]
    %v208 = vsel %vm148, %v196, 0
    %v211 = vsel %vm148, %v197, 0
    %213 = vmatpush.msra.mxu0 0.0
    %214 = vmatpush.msra.mxu0 0.0
    %215 = vmatpush.msra.mxu0 0.0
    %216 = vmatpush.msra.mxu0 0.0
    %217 = vmatpush.msra.mxu0 0.0
    %218 = vmatpush.msra.mxu0 0.0
    %219 = vmatpush.msra.mxu0 0.0
    %220 = vmatpush.msra.mxu0 0.0
    %221 = vmatpush.msra.mxu0 %v205
    %222 = vmatpush.msra.mxu0 %v204
    %223 = vmatpush.msra.mxu0 %v203
    %224 = vmatpush.msra.mxu0 %v202
    %225 = vmatpush.msra.mxu0 %v201
    %226 = vmatpush.msra.mxu0 %v200
    %227 = vmatpush.msra.mxu0 %v199
    %228 = vmatpush.msra.mxu0 %v198
    %229 = vmatmul.f32.gmra.mxu0 %v208
    %v230 = vpop.f32.mrf.mxu0
    %v231 = vadd.f32 0.0, %v230
    %232 = vmatmul.f32.gmra.mxu0 %v211
    %v233 = vpop.f32.mrf.mxu0
    %v234 = vadd.f32 0.0, %v233
    %235 = vdwg.mxu0
    %v236 = vpack.c.bf16 %v234, %v231
    %v238 = vperm.slane %v206, 0
    %240 = vmatpush.bf16.msra.mxu0 0
    %241 = vmatpush.bf16.msra.mxu0 0
    %242 = vmatpush.bf16.msra.mxu0 0
    %243 = vmatpush.bf16.msra.mxu0 0
    %244 = vmatpush.bf16.msra.mxu0 0
    %245 = vmatpush.bf16.msra.mxu0 0
    %246 = vmatpush.bf16.msra.mxu0 0
    %247 = vmatpush.bf16.msra.mxu0 %v236
    %248 = vmatmul.bf16.gmra.mxu0 %v121
    %v249 = vpop.f32.mrf.mxu0
    %v250 = vadd.f32 %v238, %v249
    %v251 = vpop.f32.mrf.mxu0
    %v252 = vadd.f32 %v238, %v251
    %253 = vdwg.mxu0
    %v254 = vmax.f32 %v250, 0.0
    %v255 = vmax.f32 %v252, 0.0
    %v256 = vld [vmem:[%s2] sm:$0xff]
    %v257 = vld [vmem:[%s2 + $0x8] sm:$0xff]
    %v258 = vld [vmem:[%s3] sm:$0xff]
    %v259 = vld [vmem:[%s3 + $0x8] sm:$0xff]
    %v260 = vld [vmem:[%s10] sm:$0x1]
    %v261 = vld [vmem:[#allocation2] sm:$0x1]
    %v262 = vld [vmem:[%s12] sm:$0xff]
    %v263 = vld [vmem:[%s12 + $0x8] sm:$0xff]
    %v264 = vld [vmem:[%s12 + $0x10] sm:$0xff]
    %v265 = vld [vmem:[%s12 + $0x18] sm:$0xff]
    %v266 = vld [vmem:[%s12 + $0x20] sm:$0xff]
    %v267 = vld [vmem:[%s12 + $0x28] sm:$0xff]
    %v268 = vld [vmem:[%s12 + $0x30] sm:$0xff]
    %v269 = vld [vmem:[%s12 + $0x38] sm:$0xff]
    %v270 = vld [vmem:[%s13] sm:$0x1]
    %v271 = vld [vmem:[%s14] sm:$0xff]
    %v272 = vld [vmem:[%s14 + $0x8] sm:$0xff]
    %v273 = vld [vmem:[#allocation3] sm:$0x1]
    %v275 = vperm.slane %v260, 0
    %v277 = vmul.f32 %v258, %v275
    %v278 = vmul.f32 %v259, %v275
    %vm279 = vcmask 31744
    %v280 = vsel %vm279, %v277, 0.0
    %281 = vadd.xlane.f32.xlu0 %v280
    %v282 = vpop.xlane.xlu0 %281
    %v283 = vsel %vm279, %v278, 0.0
    %284 = vadd.xlane.f32.xlu0 %v283
    %v285 = vpop.xlane.xlu0 %284
    %v287 = vperm.slane %v261, 0
    %v289 = vadd.f32 %v282, %v287
    %v290 = vadd.f32 %v285, %v287
    %vm291 = vcmp.gt.f32.partialorder %v256, 0.0
    %vm292 = vcmp.gt.f32.partialorder %v257, 0.0
    %294 = vset.pattern.permute.xlu0 0
    %295 = vperm.xlu0 %294, %v289
    %v296 = vpop.permute.xlu0 %295
    %299 = vset.pattern.permute.xlu0 0
    %300 = vperm.xlu0 %299, %v290
    %v301 = vpop.permute.xlu0 %300
    %v303 = vsel %vm291, %v296, -1e+30
    %v304 = vsel %vm292, %v301, -1e+30
    %vm305 = vcmask 15360
    %v306 = vsel %vm305, %v303, -inf
    %v307 = vsel %vm305, %v304, -inf
    %v308 = vmax.f32 %v306, %v307
    %v309 = vrot.slane %v308, 4
    %v310 = vmax.f32 %v308, %v309
    %v311 = vrot.slane %v310, 2
    %v312 = vmax.f32 %v310, %v311
    %v313 = vrot.slane %v312, 1
    %v314 = vmax.f32 %v312, %v313
    %v315 = vsub.f32 %v303, %v314
    %v316 = vsub.f32 %v304, %v314
    %v317 = vmul.f32 %v315, 1.442695
    %v318 = vpow.pop %v317
    %v319 = vmul.f32 %v316, 1.442695
    %v320 = vpow.pop %v319
    %v321 = vmul.f32 %v318, %v256
    %v322 = vmul.f32 %v320, %v257
    %v323 = vsel %vm305, %v321, 0.0
    %v324 = vsel %vm305, %v322, 0.0
    %v325 = vadd.f32 %v323, %v324
    %v326 = vrot.slane %v325, 4
    %v327 = vadd.f32 %v325, %v326
    %v328 = vrot.slane %v327, 2
    %v329 = vadd.f32 %v327, %v328
    %v330 = vrot.slane %v329, 1
    %v331 = vadd.f32 %v329, %v330
    %v332 = vmax.f32 %v331, 1e-20
    %v333 = vrcp.pop %v332
    %v334 = vmul.f32 %v332, %v333
    %v335 = vsub.f32 1.0, %v334
    %v336 = vmul.f32 %v333, %v335
    %v337 = vadd.f32 %v333, %v336
    %vm338 = vweird.f32 %v332
    %vm339 = vweird.f32 %v333
    %vm340 = vmor %vm338, %vm339
    %v341 = vsel %vm340, %v333, %v337
    %v342 = vand.u32 2147483647, %v332
    %vm343 = vcmp.eq.f32.partialorder %v342, 8.507059e+37
    %v344 = vand.u32 %v332, 2147483648
    %v345 = vor.u32 1.1754944e-38, %v344
    %v346 = vsel %vm343, %v345, %v341
    %v347 = vmul.f32 %v321, %v346
    %v348 = vmul.f32 %v322, %v346
    %349 = vxpose.xlu0.b32.start [1/16] %v347, 128
    %350 = vxpose.xlu0.b32.cont [2/16] %v348, 128
    %351 = vxpose.xlu0.b32.cont [3/16] 0.0, 128
    %352 = vxpose.xlu0.b32.cont [4/16] 0.0, 128
    %353 = vxpose.xlu0.b32.cont [5/16] 0.0, 128
    %354 = vxpose.xlu0.b32.cont [6/16] 0.0, 128
    %355 = vxpose.xlu0.b32.cont [7/16] 0.0, 128
    %356 = vxpose.xlu0.b32.cont [8/16] 0.0, 128
    %357 = vxpose.xlu0.b32.cont [9/16] 0.0, 128
    %358 = vxpose.xlu0.b32.cont [10/16] 0.0, 128
    %359 = vxpose.xlu0.b32.cont [11/16] 0.0, 128
    %360 = vxpose.xlu0.b32.cont [12/16] 0.0, 128
    %361 = vxpose.xlu0.b32.cont [13/16] 0.0, 128
    %362 = vxpose.xlu0.b32.cont [14/16] 0.0, 128
    %363 = vxpose.xlu0.b32.cont [15/16] 0.0, 128
    %364 = vxpose.xlu0.b32.end [16/16] 0.0, 128
    %v365 = vpop.trf.xlu0
    %v366 = vpop.trf.xlu0
    %v367 = vpop.trf.xlu0
    %v368 = vpop.trf.xlu0
    %v369 = vpop.trf.xlu0
    %v370 = vpop.trf.xlu0
    %v371 = vpop.trf.xlu0
    %v372 = vpop.trf.xlu0
    %v373 = vpop.trf.xlu0
    %v374 = vpop.trf.xlu0
    %v375 = vpop.trf.xlu0
    %v376 = vpop.trf.xlu0
    %v377 = vpop.trf.xlu0
    %v378 = vpop.trf.xlu0
    %v379 = vpop.trf.xlu0
    %v380 = vpop.trf.xlu0
    %v382 = vsel %vm119, %v365, 0
    %384 = vmatpush.msra.mxu0 0.0
    %385 = vmatpush.msra.mxu0 0.0
    %386 = vmatpush.msra.mxu0 0.0
    %387 = vmatpush.msra.mxu0 0.0
    %388 = vmatpush.msra.mxu0 0.0
    %389 = vmatpush.msra.mxu0 0.0
    %390 = vmatpush.msra.mxu0 0.0
    %391 = vmatpush.msra.mxu0 0.0
    %392 = vmatpush.msra.mxu0 0.0
    %393 = vmatpush.msra.mxu0 0.0
    %394 = vmatpush.msra.mxu0 0.0
    %395 = vmatpush.msra.mxu0 0.0
    %396 = vmatpush.msra.mxu0 0.0
    %397 = vmatpush.msra.mxu0 0.0
    %398 = vmatpush.msra.mxu0 %v255
    %399 = vmatpush.msra.mxu0 %v254
    %400 = vmatmul.f32.gmra.mxu0 %v382
    %v401 = vpop.f32.mrf.mxu0
    %v402 = vadd.f32 0.0, %v401
    %403 = vdwg.mxu0
    %v405 = vperm.slane %v270, 0
    %v408 = vsel %vm148, %v402, 0
    %410 = vmatpush.msra.mxu0 0.0
    %411 = vmatpush.msra.mxu0 0.0
    %412 = vmatpush.msra.mxu0 0.0
    %413 = vmatpush.msra.mxu0 0.0
    %414 = vmatpush.msra.mxu0 0.0
    %415 = vmatpush.msra.mxu0 0.0
    %416 = vmatpush.msra.mxu0 0.0
    %417 = vmatpush.msra.mxu0 0.0
    %418 = vmatpush.msra.mxu0 %v269
    %419 = vmatpush.msra.mxu0 %v268
    %420 = vmatpush.msra.mxu0 %v267
    %421 = vmatpush.msra.mxu0 %v266
    %422 = vmatpush.msra.mxu0 %v265
    %423 = vmatpush.msra.mxu0 %v264
    %424 = vmatpush.msra.mxu0 %v263
    %425 = vmatpush.msra.mxu0 %v262
    %426 = vmatmul.f32.gmra.mxu0 %v408
    %v427 = vpop.f32.mrf.mxu0
    %v428 = vadd.f32 %v405, %v427
    %429 = vdwg.mxu0
    %v430 = vmax.f32 %v428, 0.0
    %v432 = vperm.slane %v273, 0
    %v435 = vsel %vm119, %v430, 0
    %437 = vmatpush.msra.mxu0 0.0
    %438 = vmatpush.msra.mxu0 0.0
    %439 = vmatpush.msra.mxu0 0.0
    %440 = vmatpush.msra.mxu0 0.0
    %441 = vmatpush.msra.mxu0 0.0
    %442 = vmatpush.msra.mxu0 0.0
    %443 = vmatpush.msra.mxu0 0.0
    %444 = vmatpush.msra.mxu0 0.0
    %445 = vmatpush.msra.mxu0 0.0
    %446 = vmatpush.msra.mxu0 0.0
    %447 = vmatpush.msra.mxu0 0.0
    %448 = vmatpush.msra.mxu0 0.0
    %449 = vmatpush.msra.mxu0 0.0
    %450 = vmatpush.msra.mxu0 0.0
    %451 = vmatpush.msra.mxu0 %v272
    %452 = vmatpush.msra.mxu0 %v271
    %453 = vmatmul.f32.gmra.mxu0 %v435
    %v454 = vpop.f32.mrf.mxu0
    %v455 = vadd.f32 %v432, %v454
    %456 = vdwg.mxu0
    %vm457 = vcmask 1024
    %458 = vst.msk [vmem:[%s16] sm:$0x3] %vm457, %v455
    // Predicated region
    $region70: #{_forward_resident.1} parent=1 // pred_check
      _
    $region71: #{_forward_resident.1} parent=1 // pred_check_branch
      %460 = sbr.rel (0) target = $region73
    $region72: #{_forward_resident.1} parent=1 // pred_region
      _
    $region73: #{_forward_resident.1} parent=1 // pred_fallthru
      _
    // Predicated region
    $region74: #{_forward_resident.1} parent=1 // pred_check
      _
    $region75: #{_forward_resident.1} parent=1 // pred_check_branch
      %462 = sbr.rel (0) target = $region77
    $region76: #{_forward_resident.1} parent=1 // pred_region
      _
    $region77: #{_forward_resident.1} parent=1 // pred_fallthru
      _
    %463 = vsyncpa [#allocation5], 1

</llo_original>
